<compile_context>
chip_gen: v7x
topology: tpu7x:2x2x1
jax: 0.10.0
libtpu: 0.0.40
codegen_flags: <defaults>
</compile_context>

<pallas_src>
import jax
import jax.numpy as jnp
from jax.experimental import pallas as pl
from jax.experimental.pallas import tpu as pltpu

EPS = 1e-6


def _round_up(n, m):
    return ((n + m - 1) // m) * m


def _layernorm_kernel(alpha_ref, bias_ref, x_ref, o_ref):
    # alpha_ref / bias_ref: (1,) scalars in SMEM
    # x_ref / o_ref: (row_tile, D) tile in VMEM
    x = x_ref[...].astype(jnp.float32)
    d = x.shape[-1]
    mean = jnp.mean(x, axis=-1, keepdims=True)
    diff = x - mean
    # torch.Tensor.std is the *unbiased* estimator (divide by N-1); guard d==1.
    inv_nm1 = jnp.float32(1.0 / max(d - 1, 1))
    var = jnp.sum(diff * diff, axis=-1, keepdims=True) * inv_nm1
    std = jnp.sqrt(var)
    # Per-row (row_tile, 1) reciprocal replaces the full-tile divide, and the
    # scalar alpha is folded into the per-row scale so the tile body is one FMA.
    # approx=True would push this onto the EUP slot; kept exact so results
    # match the reference within 1e-5 (flip to approx=True if tolerance allows).
    inv = pl.reciprocal(std + jnp.float32(EPS), approx=False)
    scale = alpha_ref[0] * inv
    # note: eps is added to std (not variance), matching the PyTorch module
    o_ref[...] = (diff * scale + bias_ref[0]).astype(o_ref.dtype)


def layer_norm_pallas(x, alpha, bias, *, row_tile=None,
                      target_block_bytes=2 << 20):
    """Custom LayerNormalization over the last axis via a Pallas TPU kernel.

    row_tile=None -> auto-pick the largest tile such that one block is about
    `target_block_bytes` (default 2 MiB), rounded to a multiple of 16 rows and
    capped at 1024 rows.  Rows are padded up to the tile and sliced back.
    """
    orig_shape = x.shape
    d = orig_shape[-1]
    itemsize = jnp.dtype(x.dtype).itemsize
    x2d = x.reshape(-1, d)
    rows = x2d.shape[0]

    if row_tile is None:
        rt = target_block_bytes // max(1, d * itemsize)
        row_tile = int(max(16, min(1024, rt)))
    # Multiple of 16 rows (valid sublane tiling for both f32 and bf16); never
    # larger than the (padded) row count.
    row_tile = max(16, _round_up(int(row_tile), 16))
    row_tile = min(row_tile, _round_up(rows, 16))

    padded_rows = _round_up(rows, row_tile)
    if padded_rows != rows:
        # Zero-padded rows normalize to bias (std=0 -> diff*1/eps = 0); they
        # are sliced off below, so no NaNs and no effect on real rows.
        x2d = jnp.pad(x2d, ((0, padded_rows - rows), (0, 0)))

    # VMEM budget: (in + out) * double-buffer = 4 blocks, plus headroom.
    block_bytes = row_tile * d * itemsize
    vmem_limit = int(max(32 << 20, 4 * block_bytes + (4 << 20)))

    # TODO(synk): for d_model not a multiple of 128 (like the toy demo's 32),
    # the output stores are lane-masked; real model dims (512/1024/4096) are
    # already lane-dense so no padding of the lane axis is done here.
    grid = (padded_rows // row_tile,)
    out = pl.pallas_call(
        _layernorm_kernel,
        out_shape=jax.ShapeDtypeStruct((padded_rows, d), x.dtype),
        grid=grid,
        in_specs=[
            pl.BlockSpec(memory_space=pltpu.MemorySpace.SMEM),  # alpha (1,)
            pl.BlockSpec(memory_space=pltpu.MemorySpace.SMEM),  # bias  (1,)
            pl.BlockSpec((row_tile, d), lambda i: (i, 0)),
        ],
        out_specs=pl.BlockSpec((row_tile, d), lambda i: (i, 0)),
        compiler_params=pltpu.CompilerParams(
            dimension_semantics=("parallel",),
            vmem_limit_bytes=vmem_limit,
        ),
    )(alpha, bias, x2d)

    if padded_rows != rows:
        out = out[:rows]
    return out.reshape(orig_shape)


def decoder_forward(x, encoder_output, src_mask, tgt_mask, params):
    """Mirror of Decoder.forward: run each layer, then the final LayerNorm."""
    # TODO(synk): the ModuleList `layers` is supplied externally in the PyTorch
    # module and its block structure is not defined in the given source; here
    # the list is empty, so only the concretely-defined final norm is applied.
    for layer_fn in params["layers"]:
        x = layer_fn(x, encoder_output, src_mask, tgt_mask)
    return layer_norm_pallas(x, params["norm_alpha"], params["norm_bias"])


def reference_layer_norm(x, alpha, bias):
    xf = x.astype(jnp.float32)
    mean = jnp.mean(xf, axis=-1, keepdims=True)
    std = jnp.std(xf, axis=-1, keepdims=True, ddof=1)  # unbiased, like torch
    return (alpha * (xf - mean) / (std + EPS) + bias).astype(x.dtype)


if __name__ == "__main__":
    key = jax.random.PRNGKey(0)
    k1, k2, k3 = jax.random.split(key, 3)

    # Deterministic parameter init matching LayerNormalization.__init__:
    # alpha = ones(1), bias = zeros(1).
    params = {
        "layers": [],  # externally-supplied ModuleList; empty here (see TODO)
        "norm_alpha": jnp.ones((1,), dtype=jnp.float32),
        "norm_bias": jnp.zeros((1,), dtype=jnp.float32),
    }

    # --- case 1: f32, small transformer-like shapes -------------------------
    batch, seq, d_model = 2, 8, 32
    x = jax.random.normal(k1, (batch, seq, d_model), dtype=jnp.float32)
    encoder_output = jax.random.normal(k2, (batch, seq, d_model), dtype=jnp.float32)
    src_mask = jnp.ones((batch, 1, seq, seq), dtype=jnp.float32)
    tgt_mask = jnp.tril(jnp.ones((seq, seq), dtype=jnp.float32))[None, None]

    out = decoder_forward(x, encoder_output, src_mask, tgt_mask, params)
    out = jax.block_until_ready(out)
    ref = reference_layer_norm(x, params["norm_alpha"], params["norm_bias"])
    assert out.shape == x.shape
    assert jnp.allclose(out, ref, atol=1e-5, rtol=1e-5)

    # --- case 2: bf16 I/O, row count not divisible by the tile --------------
    xb = jax.random.normal(k3, (3, 7, 128), dtype=jnp.float32).astype(jnp.bfloat16)
    outb = layer_norm_pallas(xb, params["norm_alpha"], params["norm_bias"])
    outb = jax.block_until_ready(outb)
    refb = reference_layer_norm(xb, params["norm_alpha"], params["norm_bias"])
    assert outb.shape == xb.shape and outb.dtype == jnp.bfloat16
    assert jnp.allclose(outb.astype(jnp.float32), refb.astype(jnp.float32),
                        atol=1e-2, rtol=1e-2)

    print("KERNEL_OK")
</pallas_src>

<mosaic_0001>
module attributes {stable_mosaic.version = 11 : i64} {
  func.func @_layernorm_kernel(%arg0: i32, %arg1: memref<1xf32, #tpu.memory_space<smem>>, %arg2: memref<1xf32, #tpu.memory_space<smem>>, %arg3: memref<16x32xf32, #tpu.memory_space<vmem>>, %arg4: memref<16x32xf32, #tpu.memory_space<vmem>>) attributes {dimension_semantics = [#tpu.dimension_semantics<parallel>], iteration_bounds = array<i64: 1>, scalar_prefetch = 0 : i64, scratch_operands = 0 : i64, tpu.core_type = #tpu.core_type<tc>, window_params = [{transform_indices = @transform_0, window_bounds = array<i64: 1>}, {transform_indices = @transform_1, window_bounds = array<i64: 1>}, {transform_indices = @transform_2, window_bounds = array<i64: 16, 32>}, {transform_indices = @transform_3, window_bounds = array<i64: 16, 32>}]} {
    %c0 = arith.constant 0 : index
    %c0_0 = arith.constant 0 : index
    %0 = vector.load %arg3[%c0, %c0_0] : memref<16x32xf32, #tpu.memory_space<vmem>>, vector<16x32xf32>
    %cst = arith.constant dense<0.000000e+00> : vector<16xf32>
    %1 = vector.multi_reduction <add>, %0, %cst [1] : vector<16x32xf32> to vector<16xf32>
    %2 = vector.shape_cast %1 : vector<16xf32> to vector<16x1xf32>
    %cst_1 = arith.constant 3.200000e+01 : f32
    %3 = vector.broadcast %cst_1 : f32 to vector<16x1xf32>
    %4 = arith.divf %2, %3 : vector<16x1xf32>
    %5 = vector.broadcast %4 : vector<16x1xf32> to vector<16x32xf32>
    %6 = arith.subf %0, %5 : vector<16x32xf32>
    %7 = arith.mulf %6, %6 : vector<16x32xf32>
    %cst_2 = arith.constant dense<0.000000e+00> : vector<16xf32>
    %8 = vector.multi_reduction <add>, %7, %cst_2 [1] : vector<16x32xf32> to vector<16xf32>
    %9 = vector.shape_cast %8 : vector<16xf32> to vector<16x1xf32>
    %cst_3 = arith.constant 0.0322580636 : f32
    %10 = vector.broadcast %cst_3 : f32 to vector<16x1xf32>
    %11 = arith.mulf %9, %10 : vector<16x1xf32>
    %12 = math.sqrt %11 : vector<16x1xf32>
    %cst_4 = arith.constant 9.99999997E-7 : f32
    %13 = vector.broadcast %cst_4 : f32 to vector<16x1xf32>
    %14 = arith.addf %12, %13 : vector<16x1xf32>
    %15 = tpu.reciprocal %14 : vector<16x1xf32> -> vector<16x1xf32>
    %c0_5 = arith.constant 0 : index
    %16 = memref.load %arg1[%c0_5] : memref<1xf32, #tpu.memory_space<smem>>
    %17 = vector.broadcast %16 : f32 to vector<16x1xf32>
    %18 = arith.mulf %17, %15 : vector<16x1xf32>
    %19 = vector.broadcast %18 : vector<16x1xf32> to vector<16x32xf32>
    %20 = arith.mulf %6, %19 : vector<16x32xf32>
    %c0_6 = arith.constant 0 : index
    %21 = memref.load %arg2[%c0_6] : memref<1xf32, #tpu.memory_space<smem>>
    %22 = vector.broadcast %21 : f32 to vector<16x32xf32>
    %23 = arith.addf %20, %22 : vector<16x32xf32>
    %c0_7 = arith.constant 0 : index
    %c0_8 = arith.constant 0 : index
    %24 = vector.load %arg4[%c0_7, %c0_8] : memref<16x32xf32, #tpu.memory_space<vmem>>, vector<16x32xf32>
    tpu.vector_store %arg4[%c0_7, %c0_8], %23 {strides = array<i32>} : memref<16x32xf32, #tpu.memory_space<vmem>>, vector<16x32xf32>,
    return
  }
  func.func @transform_0(%arg0: i32) -> i32 {
    %c0_i32 = arith.constant 0 : i32
    %c0_i32_0 = arith.constant 0 : i32
    return %c0_i32 : i32
  }
  func.func @transform_1(%arg0: i32) -> i32 {
    %c0_i32 = arith.constant 0 : i32
    %c0_i32_0 = arith.constant 0 : i32
    return %c0_i32 : i32
  }
  func.func @transform_2(%arg0: i32) -> (i32, i32) {
    %c0_i32 = arith.constant 0 : i32
    %c0_i32_0 = arith.constant 0 : i32
    return %arg0, %c0_i32 : i32, i32
  }
  func.func @transform_3(%arg0: i32) -> (i32, i32) {
    %c0_i32 = arith.constant 0 : i32
    %c0_i32_0 = arith.constant 0 : i32
    return %arg0, %c0_i32 : i32, i32
  }
}

</mosaic_0001>

<llo_original>
// kernel: tpu_custom_call.1
$region0: #{tpu_custom_call.1}
  #allocation0 [shape = 'u32[]', space=smem, size = 0x4, offset = 0x4, fixed_abs, tag = 'smem constant byte address 0x4 - core index']
  #allocation1 [shape = 'u32[144,128]{1,0:T(1,128)}', space=vmem, size = 0x12000, scoped, tag = 'internal scratch']
  #allocation2 [shape = 'f32[1]{0:T(128)S(6)}', space=smem, size = 0x200, scoped, tag = 'scoped memory for tpu_custom_call.1']
  #allocation3 [shape = 'f32[1]{0:T(128)S(6)}', space=smem, size = 0x200, scoped, tag = 'scoped memory for tpu_custom_call.1']
  %s0 = inlined_call_operand.<no memory space> [shape: f32[1], index: 0, kind: input, shape index: {}]
  %s1 = inlined_call_operand.<no memory space> [shape: f32[1], index: 1, kind: input, shape index: {}]
  %s2 = inlined_call_operand.hbm [shape: f32[16,32], index: 2, kind: input, shape index: {}]
  %s3 = inlined_call_operand.hbm [shape: f32[16,32], index: 3, kind: output, shape index: {}]
  %s4 = sld [smem:[#allocation0]]
  $region26: #{tpu_custom_call.1} parent=0
    _
  %s6 = ssub.s32 1, %s4
  %s7 = scalar_select 0, %s6, %s4
  %8 = sst [smem:[#allocation2]] %s0
  %9 = sst [smem:[#allocation3]] %s1
  $region1: #{tpu_custom_call.1} parent=0
    #allocation4 [shape = 'u8[8192]{0}', space=vmem, size = 0x2000, scoped, tag = 'input window, operand 2, single buffered']
    #allocation5 [shape = 's32[1]{0}', space=sflag, size = 0x4, scoped, tag = 'scoped memory for tpu_custom_call.1']
    #allocation6 [shape = 's32[1]{0}', space=sflag, size = 0x4, scoped, tag = 'scoped memory for tpu_custom_call.1']
    #allocation7 [shape = 'u8[8192]{0}', space=vmem, size = 0x2000, scoped, tag = 'output window, operand 0, single buffered']
    %10 = vsyncpa [#allocation5], 0
    %11 = vsyncpa [#allocation6], 0
    // Predicated region
    $region2: #{tpu_custom_call.1} parent=1 // pred_check
      _
    $region3: #{tpu_custom_call.1} parent=1 // pred_check_branch
      %13 = sbr.rel (0) target = $region5
    $region4: #{tpu_custom_call.1} parent=1 // pred_region
      _
    $region5: #{tpu_custom_call.1} parent=1 // pred_fallthru
      _
    // Predicated region
    $region6: #{tpu_custom_call.1} parent=1 // pred_check
      _
    $region7: #{tpu_custom_call.1} parent=1 // pred_check_branch
      %15 = sbr.rel (0) target = $region9
    $region8: #{tpu_custom_call.1} parent=1 // pred_region
      _
    $region9: #{tpu_custom_call.1} parent=1 // pred_fallthru
      _
    // Predicated region
    $region10: #{tpu_custom_call.1} parent=1 // pred_check
      _
    $region11: #{tpu_custom_call.1} parent=1 // pred_check_branch
      %17 = sbr.rel (0) target = $region13
    $region12: #{tpu_custom_call.1} parent=1 // pred_region
      %s19 = ssub.s32 256, 256
      %20 = vsyncadd [#allocation5], %s19
      %s21 = sshll.u32 [#allocation4], 4
      %s22 = int_to_ptr.vmem [resolvable:$true] %s21
      %27 = dma.hbm_to_vmem [thread:$0]  %s2, 256, %s22, [#allocation5], 128, 128, 8
    $region13: #{tpu_custom_call.1} parent=1 // pred_fallthru
      _
    // Predicated region
    $region14: #{tpu_custom_call.1} parent=1 // pred_check
      _
    $region15: #{tpu_custom_call.1} parent=1 // pred_check_branch
      %29 = sbr.rel (0) target = $region17
    $region16: #{tpu_custom_call.1} parent=1 // pred_region
      %30 = dma.done [#allocation5], 256
    $region17: #{tpu_custom_call.1} parent=1 // pred_fallthru
      _
    %v31 = vld [vmem:[#allocation4] sm:$0xff]
    %v32 = vld [vmem:[#allocation4 + $0x8] sm:$0xff]
    %vm33 = vcmask 261120
    %v34 = vsel %vm33, %v31, 0.0
    %35 = vadd.xlane.f32.xlu0 %v34
    %v36 = vpop.xlane.xlu0 %35
    %v37 = vsel %vm33, %v32, 0.0
    %38 = vadd.xlane.f32.xlu0 %v37
    %v39 = vpop.xlane.xlu0 %38
    %v40 = vrcp.pop 32.0
    %v41 = vmul.f32 %v36, %v40
    %v42 = vmul.f32 %v39, %v40
    %v43 = vsub.f32 %v31, %v41
    %v44 = vsub.f32 %v32, %v42
    %v45 = vmul.f32 %v43, %v43
    %v46 = vmul.f32 %v44, %v44
    %v47 = vsel %vm33, %v45, 0.0
    %48 = vadd.xlane.f32.xlu0 %v47
    %v49 = vpop.xlane.xlu0 %48
    %v50 = vsel %vm33, %v46, 0.0
    %51 = vadd.xlane.f32.xlu0 %v50
    %v52 = vpop.xlane.xlu0 %51
    %v53 = vmul.f32 %v49, 0.032258064
    %v54 = vmul.f32 %v52, 0.032258064
    %v55 = vrsqrt.pop %v53
    %v56 = vmul.f32 %v53, %v55
    %vm57 = vcmp.eq.f32.partialorder %v53, inf
    %v58 = vsel %vm57, %v53, %v56
    %vm59 = vcmp.eq.f32.partialorder %v53, 0.0
    %v60 = vand.u32 %v53, 2147483648
    %v61 = vsel %vm59, %v60, %v58
    %v62 = vrsqrt.pop %v54
    %v63 = vmul.f32 %v54, %v62
    %vm64 = vcmp.eq.f32.partialorder %v54, inf
    %v65 = vsel %vm64, %v54, %v63
    %vm66 = vcmp.eq.f32.partialorder %v54, 0.0
    %v67 = vand.u32 %v54, 2147483648
    %v68 = vsel %vm66, %v67, %v65
    %v69 = vadd.f32 %v61, 1e-06
    %v70 = vadd.f32 %v68, 1e-06
    %v71 = vrcp.pop %v69
    %v72 = vrcp.pop %v70
    %s73 = sld [smem:[#allocation2]]
    %v74 = vstv %s73
    %v75 = vmul.f32 %v74, %v71
    %v76 = vmul.f32 %v74, %v72
    %v77 = vmul.f32 %v43, %v75
    %v78 = vmul.f32 %v44, %v76
    %s79 = sld [smem:[#allocation3]]
    %v80 = vstv %s79
    %v81 = vadd.f32 %v77, %v80
    %v82 = vadd.f32 %v78, %v80
    %83 = vst.msk [vmem:[#allocation7] sm:$0xff] %vm33, %v81
    %84 = vst.msk [vmem:[#allocation7 + $0x8] sm:$0xff] %vm33, %v82
    // Predicated region
    $region18: #{tpu_custom_call.1} parent=1 // pred_check
      _
    $region19: #{tpu_custom_call.1} parent=1 // pred_check_branch
      %86 = sbr.rel (0) target = $region21
    $region20: #{tpu_custom_call.1} parent=1 // pred_region
      %s88 = ssub.s32 256, 256
      %89 = vsyncadd [#allocation6], %s88
      %s90 = sshll.u32 [#allocation7], 4
      %s91 = int_to_ptr.vmem [resolvable:$true] %s90
      %96 = dma.vmem_to_hbm [thread:$0]  %s91, 256, %s3, [#allocation6], 128, 128, 8
    $region21: #{tpu_custom_call.1} parent=1 // pred_fallthru
      _
    // Predicated region
    $region22: #{tpu_custom_call.1} parent=1 // pred_check
      _
    $region23: #{tpu_custom_call.1} parent=1 // pred_check_branch
      %98 = sbr.rel (0) target = $region25
    $region24: #{tpu_custom_call.1} parent=1 // pred_region
      %99 = dma.done [#allocation6], 256
    $region25: #{tpu_custom_call.1} parent=1 // pred_fallthru
      _
    %100 = vsyncpa [#allocation5], 1
    %101 = vsyncpa [#allocation6], 1

</llo_original>
